<compile_context>
chip_gen: v7x
topology: tpu7x:2x2x1
jax: 0.10.0
libtpu: 0.0.40
codegen_flags: <defaults>
</compile_context>

<pallas_src>
import functools

import jax
import jax.numpy as jnp
from jax.experimental import pallas as pl
from jax.experimental.pallas import tpu as pltpu


def _round_up(x, m):
    return (x + m - 1) // m * m


def _device_info():
    """Returns (has_two_tensorcores, physical_vmem_bytes_per_core)."""
    kind = ""
    try:
        devs = jax.devices()
        if devs:
            kind = str(getattr(devs[0], "device_kind", "") or "").lower()
    except Exception:
        pass
    is_v7 = ("v7" in kind) or ("tpu7" in kind)
    two_tc = is_v7 or ("v4" in kind) or ("v5p" in kind)
    vmem_phys = 64 * 1024 * 1024 if is_v7 else 128 * 1024 * 1024
    try:  # refine (conservatively) if the runtime exposes VMEM capacity
        info = pltpu.get_tpu_info()
        reported = int(getattr(info, "vmem_capacity_bytes", 0))
        if 0 < reported <= 256 * 1024 * 1024:
            vmem_phys = min(vmem_phys, reported)
    except Exception:
        pass
    return two_tc, vmem_phys


def _policy_loss_kernel(*refs, clip_eps_low, clip_eps_high, clip_ratio_c,
                        dual_clip, has_mask, seq_len, token_tile, chunk,
                        tiles_per_core, mask_from_tile, needs_tail):
    if has_mask:
        (lp_ref, olp_ref, adv_ref, mask_ref,
         loss_acc_ref, mask_acc_ref, clip_acc_ref) = refs
    else:
        lp_ref, olp_ref, adv_ref, loss_acc_ref, clip_acc_ref = refs
        mask_ref = None
        mask_acc_ref = None

    tb = lp_ref.shape[0]
    j = pl.program_id(1)
    if tiles_per_core:
        # Token axis split across TensorCores: global token-tile index.
        global_tile = pl.program_id(0) * tiles_per_core + j
    else:
        global_tile = j

    @pl.when(j == 0)
    def _():
        loss_acc_ref[...] = jnp.zeros_like(loss_acc_ref)
        clip_acc_ref[...] = jnp.zeros_like(clip_acc_ref)
        if has_mask:
            mask_acc_ref[...] = jnp.zeros_like(mask_acc_ref)

    tile_tok0 = global_tile * token_tile

    def tile_partials(apply_tail):
        ls = jnp.zeros((tb, 128), jnp.float32)
        cs = jnp.zeros((tb, 128), jnp.float32)
        ms = jnp.zeros((tb, 128), jnp.float32) if has_mask else None
        for c in range(token_tile // chunk):
            sl = slice(c * chunk, (c + 1) * chunk)
            lp = lp_ref[:, sl].astype(jnp.float32)
            olp = olp_ref[:, sl].astype(jnp.float32)
            adv = adv_ref[:, sl].astype(jnp.float32)
            mask = mask_ref[:, sl].astype(jnp.float32) if has_mask else None
            delta = lp - olp

            if apply_tail:
                tok = (tile_tok0 + c * chunk
                       + jax.lax.broadcasted_iota(jnp.int32, (tb, chunk), 1))
                valid = tok < seq_len
                # NaN-safe tail: zero every operand feeding the surrogate so
                # garbage lanes (stale VMEM) cannot reach the accumulators.
                delta = jnp.where(valid, delta, 0.0)
                adv = jnp.where(valid, adv, 0.0)
                if has_mask:
                    mask = jnp.where(valid, mask, 0.0)

            ratio = jnp.exp(delta)
            surr1 = ratio * adv
            surr2 = jnp.clip(ratio, 1.0 - clip_eps_low,
                             1.0 + clip_eps_high) * adv
            loss = -jnp.minimum(surr1, surr2)
            if dual_clip:
                loss = jnp.where(adv < 0.0,
                                 jnp.minimum(-adv * clip_ratio_c, loss), loss)

            if has_mask:
                lm = loss * mask
                cm = jnp.where(surr1 > surr2, mask, 0.0)
            else:
                # With delta/adv zeroed on invalid lanes, loss and the clip
                # indicator are already exactly 0 there.
                lm = loss
                cm = jnp.where(surr1 > surr2, 1.0, 0.0)

            # Fold the chunk lane-wise to 128 lanes: 128-aligned static
            # slices, pure VALU adds (no cross-lane XLU reduce).
            for cc in range(chunk // 128):
                s2 = slice(cc * 128, (cc + 1) * 128)
                ls = ls + lm[:, s2]
                cs = cs + cm[:, s2]
                if has_mask:
                    ms = ms + mask[:, s2]
        return ls, cs, ms

    def accumulate(apply_tail):
        ls, cs, ms = tile_partials(apply_tail)
        loss_acc_ref[...] += ls
        clip_acc_ref[...] += cs
        if has_mask:
            mask_acc_ref[...] += ms

    if needs_tail:
        is_tail = global_tile >= mask_from_tile

        @pl.when(is_tail)
        def _():
            accumulate(True)

        @pl.when(jnp.logical_not(is_tail))
        def _():
            accumulate(False)
    else:
        accumulate(False)


class PolicyLossPallas:
    """JAX/Pallas port of skyrl_train PolicyLoss (forward only)."""

    def __init__(self, clip_eps_low=0.2, clip_eps_high=0.2, clip_ratio_c=3.0,
                 loss_type="regular", loss_reduction="token_mean",
                 max_token_tile=8192):
        assert loss_type in ("regular", "dual_clip")
        assert loss_reduction in ("token_mean", "sequence_mean")
        self.clip_eps_low = float(clip_eps_low)
        self.clip_eps_high = float(clip_eps_high)
        self.clip_ratio_c = float(clip_ratio_c)
        self.loss_type = loss_type
        self.loss_reduction = loss_reduction
        self.max_token_tile = int(max_token_tile)

    def __call__(self, log_probs, old_log_probs, advantages, loss_mask=None):
        B, T = log_probs.shape
        has_mask = loss_mask is not None

        inputs = [log_probs, old_log_probs, advantages]
        if has_mask:
            mask = loss_mask
            if mask.dtype == jnp.bool_:
                # Keep the mask stream at 1 B/token (no host-side f32 upcast).
                mask = mask.astype(jnp.int8)
            inputs.append(mask)

        two_tc, vmem_phys = _device_info()
        vmem_limit = max(32 * 1024 * 1024, int(vmem_phys * 0.70))
        input_budget = int(vmem_limit * 0.65)   # double-buffered input tiles

        itemsizes = [jnp.dtype(a.dtype).itemsize for a in inputs]
        min_item = max(1, min(itemsizes))
        sublane_mult = 8 * (4 // min_item)      # f32:8, bf16:16, int8:32

        # Batch split across cores only on 2-TC chips and only when it keeps
        # every input sublane-aligned.
        if two_tc and B % (2 * sublane_mult) == 0:
            nb, TB = 2, B // 2
        else:
            nb, TB = 1, B

        # Token tile: as wide as the per-generation VMEM budget allows.
        # In-kernel temporaries are bounded by `chunk`, not TT.
        bytes_per_col = sum(itemsizes) * TB * 2          # double-buffered
        tt_cap = max(128, (input_budget // bytes_per_col) // 128 * 128)
        TT = int(min(self.max_token_tile, tt_cap, _round_up(T, 128)))
        TT = max(128, TT // 128 * 128)
        if TT >= 2048:                                   # nicer chunking
            TT = TT // 512 * 512
        nt = pl.cdiv(T, TT)
        chunk = 512 if TT % 512 == 0 else (256 if TT % 256 == 0 else 128)

        # If the batch could not be split on a 2-TC chip, split the token
        # axis across the cores instead (private accumulator slab per core).
        token_core_split = two_tc and nb == 1 and nt >= 2
        if token_core_split:
            tiles_per_core = -(-nt // 2)
            grid = (2, tiles_per_core)
            last_block = nt - 1

            def in_map(c, j):
                return (0, jnp.minimum(c * tiles_per_core + j, last_block))

            in_spec = pl.BlockSpec((B, TT), in_map)
            acc_spec = pl.BlockSpec((B, 128), lambda c, j: (0, c))
            acc_cols = 2 * 128
        else:
            tiles_per_core = 0
            grid = (nb, nt)
            in_spec = pl.BlockSpec((TB, TT), lambda i, j: (i, j))
            acc_spec = pl.BlockSpec((TB, 128), lambda i, j: (i, 0))
            acc_cols = 128

        ragged = (T % TT) != 0
        padded_tiles = token_core_split and (2 * tiles_per_core > nt)
        needs_tail = ragged or padded_tiles
        mask_from_tile = (nt - 1) if ragged else nt

        kernel = functools.partial(
            _policy_loss_kernel,
            clip_eps_low=self.clip_eps_low,
            clip_eps_high=self.clip_eps_high,
            clip_ratio_c=self.clip_ratio_c,
            dual_clip=(self.loss_type == "dual_clip"),
            has_mask=has_mask,
            seq_len=T,
            token_tile=TT,
            chunk=chunk,
            tiles_per_core=tiles_per_core,
            mask_from_tile=mask_from_tile,
            needs_tail=needs_tail,
        )

        n_out = 3 if has_mask else 2
        out_shape = tuple(jax.ShapeDtypeStruct((B, acc_cols), jnp.float32)
                          for _ in range(n_out))
        out_specs = tuple(acc_spec for _ in range(n_out))

        bytes_in = sum(a.size * jnp.dtype(a.dtype).itemsize for a in inputs)
        cost = pl.CostEstimate(flops=14 * B * T, transcendentals=B * T,
                               bytes_accessed=bytes_in + n_out * B * acc_cols * 4)

        outs = pl.pallas_call(
            kernel,
            out_shape=out_shape,
            grid_spec=pltpu.PrefetchScalarGridSpec(
                num_scalar_prefetch=0,
                grid=grid,
                in_specs=[in_spec] * len(inputs),
                out_specs=out_specs,
            ),
            compiler_params=pltpu.CompilerParams(
                dimension_semantics=("parallel", "arbitrary"),
                vmem_limit_bytes=vmem_limit),
            cost_estimate=cost,
        )(*inputs)

        # ----- tiny final reductions / scalar math in plain JAX --------------
        if has_mask:
            loss_acc, mask_acc, clip_acc = outs
            mask_row = jnp.sum(mask_acc, axis=-1)            # (B,)
        else:
            loss_acc, clip_acc = outs
            mask_row = jnp.full((B,), float(T), dtype=jnp.float32)

        loss_row = jnp.sum(loss_acc, axis=-1)                # (B,)
        clip_row = jnp.sum(clip_acc, axis=-1)                # (B,)

        total_mask = jnp.sum(mask_row)
        clip_ratio = jnp.sum(clip_row) / total_mask

        if self.loss_reduction == "token_mean":
            loss = jnp.sum(loss_row) / total_mask
        else:
            # sequence_mean: fully-masked rows give 0/0 = NaN, same as PyTorch.
            loss = jnp.mean(loss_row / mask_row)

        # TODO(synk): PyTorch returns clip_ratio via .item() (host sync);
        # here it stays a JAX scalar.
        return loss, clip_ratio


def _reference(log_probs, old_log_probs, advantages, loss_mask=None,
               clip_lo=0.2, clip_hi=0.2, clip_c=3.0,
               loss_type="regular", loss_reduction="token_mean"):
    lp = log_probs.astype(jnp.float32)
    olp = old_log_probs.astype(jnp.float32)
    adv = advantages.astype(jnp.float32)
    mask = jnp.ones_like(lp) if loss_mask is None else loss_mask.astype(jnp.float32)
    ratio = jnp.exp(lp - olp)
    surr1 = ratio * adv
    surr2 = jnp.clip(ratio, 1 - clip_lo, 1 + clip_hi) * adv
    loss = -jnp.minimum(surr1, surr2)
    ind = ((-surr2) > (-surr1)).astype(jnp.float32)
    clip_ratio = jnp.sum(ind * mask) / jnp.sum(mask)
    if loss_type == "dual_clip":
        loss = jnp.where(adv < 0, jnp.minimum(-adv * clip_c, loss), loss)
    if loss_reduction == "token_mean":
        loss = jnp.sum(loss * mask) / jnp.sum(mask)
    else:
        loss = jnp.mean(jnp.sum(loss * mask, -1) / jnp.sum(mask, -1))
    return loss, clip_ratio


if __name__ == "__main__":
    ok = True

    def close(a, b, atol, rtol):
        return bool(jnp.allclose(a, b, atol=atol, rtol=rtol))

    # --- Test 1: small f32 inputs, all four config combinations -------------
    B, T = 2, 8
    k1, k2, k3, k4 = jax.random.split(jax.random.PRNGKey(0), 4)
    lp = -jax.nn.softplus(jax.random.normal(k1, (B, T), jnp.float32))
    olp = lp + 0.2 * jax.random.normal(k2, (B, T), jnp.float32)
    adv = jax.random.normal(k3, (B, T), jnp.float32)
    msk = (jax.random.uniform(k4, (B, T)) > 0.25).astype(jnp.float32)
    for lt in ("regular", "dual_clip"):
        for lr in ("token_mean", "sequence_mean"):
            mod = PolicyLossPallas(loss_type=lt, loss_reduction=lr)
            loss, cr = mod(lp, olp, adv, msk)
            jax.block_until_ready((loss, cr))
            rl, rc = _reference(lp, olp, adv, msk, loss_type=lt, loss_reduction=lr)
            ok = ok and close(loss, rl, 1e-5, 1e-4) and close(cr, rc, 1e-5, 1e-4)

    # --- Test 2: bf16 inputs, bool mask (int8 stream), ragged T, forced
    #             multi-tile accumulation (token-core split on 2-TC chips) ----
    B2, T2 = 32, 300
    k5, k6, k7, k8 = jax.random.split(jax.random.PRNGKey(1), 4)
    lp2 = (-jax.nn.softplus(
        jax.random.normal(k5, (B2, T2), jnp.float32))).astype(jnp.bfloat16)
    olp2 = (lp2.astype(jnp.float32)
            + 0.2 * jax.random.normal(k6, (B2, T2), jnp.float32)).astype(jnp.bfloat16)
    adv2 = jax.random.normal(k7, (B2, T2), jnp.float32)
    msk2 = jax.random.uniform(k8, (B2, T2)) > 0.25          # bool mask
    mod = PolicyLossPallas(loss_type="dual_clip", loss_reduction="token_mean",
                           max_token_tile=128)
    loss, cr = mod(lp2, olp2, adv2, msk2)
    jax.block_until_ready((loss, cr))
    rl, rc = _reference(lp2, olp2, adv2, msk2.astype(jnp.float32),
                        loss_type="dual_clip", loss_reduction="token_mean")
    ok = ok and close(loss, rl, 1e-4, 1e-4) and close(cr, rc, 1e-3, 1e-3)

    # --- Test 3: no loss_mask (mask stream dropped), ragged T ----------------
    B3, T3 = 4, 130
    k9, k10, k11 = jax.random.split(jax.random.PRNGKey(2), 3)
    lp3 = -jax.nn.softplus(jax.random.normal(k9, (B3, T3), jnp.float32))
    olp3 = lp3 + 0.3 * jax.random.normal(k10, (B3, T3), jnp.float32)
    adv3 = jax.random.normal(k11, (B3, T3), jnp.float32)
    mod = PolicyLossPallas(loss_type="regular", loss_reduction="sequence_mean")
    loss, cr = mod(lp3, olp3, adv3, None)
    jax.block_until_ready((loss, cr))
    rl, rc = _reference(lp3, olp3, adv3, None, loss_reduction="sequence_mean")
    ok = ok and close(loss, rl, 1e-5, 1e-4) and close(cr, rc, 1e-5, 1e-4)

    # --- Test 4: f32, batch splittable on 2-TC chips, 2 token tiles ----------
    B4, T4 = 16, 256
    k12, k13, k14, k15 = jax.random.split(jax.random.PRNGKey(3), 4)
    lp4 = -jax.nn.softplus(jax.random.normal(k12, (B4, T4), jnp.float32))
    olp4 = lp4 + 0.2 * jax.random.normal(k13, (B4, T4), jnp.float32)
    adv4 = jax.random.normal(k14, (B4, T4), jnp.float32)
    msk4 = (jax.random.uniform(k15, (B4, T4)) > 0.1).astype(jnp.float32)
    mod = PolicyLossPallas(loss_type="regular", loss_reduction="token_mean",
                           max_token_tile=128)
    loss, cr = mod(lp4, olp4, adv4, msk4)
    jax.block_until_ready((loss, cr))
    rl, rc = _reference(lp4, olp4, adv4, msk4)
    ok = ok and close(loss, rl, 1e-5, 1e-4) and close(cr, rc, 1e-5, 1e-4)

    if ok:
        print("KERNEL_OK")
    else:
        print("KERNEL_MISMATCH")
</pallas_src>

<mosaic_0001>
module attributes {stable_mosaic.version = 11 : i64} {
  func.func @_policy_loss_kernel(%arg0: i32, %arg1: i32, %arg2: memref<2x128xf32, #tpu.memory_space<vmem>>, %arg3: memref<2x128xf32, #tpu.memory_space<vmem>>, %arg4: memref<2x128xf32, #tpu.memory_space<vmem>>, %arg5: memref<2x128xf32, #tpu.memory_space<vmem>>, %arg6: memref<2x128xf32, #tpu.memory_space<vmem>>, %arg7: memref<2x128xf32, #tpu.memory_space<vmem>>, %arg8: memref<2x128xf32, #tpu.memory_space<vmem>>) attributes {dimension_semantics = [#tpu.dimension_semantics<parallel>, #tpu.dimension_semantics<arbitrary>], iteration_bounds = array<i64: 1, 1>, scalar_prefetch = 0 : i64, scratch_operands = 0 : i64, tpu.core_type = #tpu.core_type<tc>, window_params = [{transform_indices = @transform_0, window_bounds = array<i64: 2, 128>}, {transform_indices = @transform_1, window_bounds = array<i64: 2, 128>}, {transform_indices = @transform_2, window_bounds = array<i64: 2, 128>}, {transform_indices = @transform_3, window_bounds = array<i64: 2, 128>}, {transform_indices = @transform_4, window_bounds = array<i64: 2, 128>}, {transform_indices = @transform_5, window_bounds = array<i64: 2, 128>}, {transform_indices = @transform_6, window_bounds = array<i64: 2, 128>}]} {
    %c0_i32 = arith.constant 0 : i32
    %0 = arith.cmpi eq, %arg1, %c0_i32 : i32
    %1 = arith.extui %0 : i1 to i32
    %c0_i32_0 = arith.constant 0 : i32
    %2 = arith.cmpi ne, %1, %c0_i32_0 : i32
    scf.if %2 {
      %cst = arith.constant 0.000000e+00 : f32
      %10 = vector.broadcast %cst : f32 to vector<2x128xf32>
      %c0 = arith.constant 0 : index
      %c0_4 = arith.constant 0 : index
      %11 = vector.load %arg6[%c0, %c0_4] : memref<2x128xf32, #tpu.memory_space<vmem>>, vector<2x128xf32>
      tpu.vector_store %arg6[%c0, %c0_4], %10 {strides = array<i32>} : memref<2x128xf32, #tpu.memory_space<vmem>>, vector<2x128xf32>,
      %cst_5 = arith.constant 0.000000e+00 : f32
      %12 = vector.broadcast %cst_5 : f32 to vector<2x128xf32>
      %c0_6 = arith.constant 0 : index
      %c0_7 = arith.constant 0 : index
      %13 = vector.load %arg8[%c0_6, %c0_7] : memref<2x128xf32, #tpu.memory_space<vmem>>, vector<2x128xf32>
      tpu.vector_store %arg8[%c0_6, %c0_7], %12 {strides = array<i32>} : memref<2x128xf32, #tpu.memory_space<vmem>>, vector<2x128xf32>,
      %cst_8 = arith.constant 0.000000e+00 : f32
      %14 = vector.broadcast %cst_8 : f32 to vector<2x128xf32>
      %c0_9 = arith.constant 0 : index
      %c0_10 = arith.constant 0 : index
      %15 = vector.load %arg7[%c0_9, %c0_10] : memref<2x128xf32, #tpu.memory_space<vmem>>, vector<2x128xf32>
      tpu.vector_store %arg7[%c0_9, %c0_10], %14 {strides = array<i32>} : memref<2x128xf32, #tpu.memory_space<vmem>>, vector<2x128xf32>,
    } else {
    }
    %c128_i32 = arith.constant 128 : i32
    %3 = arith.muli %arg1, %c128_i32 : i32
    %c0_i32_1 = arith.constant 0 : i32
    %4 = arith.cmpi sge, %arg1, %c0_i32_1 : i32
    %5 = arith.extui %4 : i1 to i32
    %c0_i32_2 = arith.constant 0 : i32
    %6 = arith.cmpi ne, %5, %c0_i32_2 : i32
    scf.if %6 {
      %cst = arith.constant 0.000000e+00 : f32
      %10 = vector.broadcast %cst : f32 to vector<2x128xf32>
      %cst_4 = arith.constant 0.000000e+00 : f32
      %11 = vector.broadcast %cst_4 : f32 to vector<2x128xf32>
      %cst_5 = arith.constant 0.000000e+00 : f32
      %12 = vector.broadcast %cst_5 : f32 to vector<2x128xf32>
      %c0 = arith.constant 0 : index
      %c0_6 = arith.constant 0 : index
      %13 = vector.load %arg2[%c0, %c0_6] : memref<2x128xf32, #tpu.memory_space<vmem>>, vector<2x128xf32>
      %c0_7 = arith.constant 0 : index
      %c0_8 = arith.constant 0 : index
      %14 = vector.load %arg3[%c0_7, %c0_8] : memref<2x128xf32, #tpu.memory_space<vmem>>, vector<2x128xf32>
      %c0_9 = arith.constant 0 : index
      %c0_10 = arith.constant 0 : index
      %15 = vector.load %arg4[%c0_9, %c0_10] : memref<2x128xf32, #tpu.memory_space<vmem>>, vector<2x128xf32>
      %c0_11 = arith.constant 0 : index
      %c0_12 = arith.constant 0 : index
      %16 = vector.load %arg5[%c0_11, %c0_12] : memref<2x128xf32, #tpu.memory_space<vmem>>, vector<2x128xf32>
      %17 = arith.subf %13, %14 : vector<2x128xf32>
      %c0_i32_13 = arith.constant 0 : i32
      %18 = arith.addi %3, %c0_i32_13 : i32
      %19 = tpu.iota {dimensions = array<i32: 1>} : vector<2x128xi32>
      %20 = vector.broadcast %18 : i32 to vector<2x128xi32>
      %21 = arith.addi %20, %19 : vector<2x128xi32>
      %c8_i32 = arith.constant 8 : i32
      %22 = vector.broadcast %c8_i32 : i32 to vector<2x128xi32>
      %23 = arith.cmpi slt, %21, %22 : vector<2x128xi32>
      %cst_14 = arith.constant 0.000000e+00 : f32
      %24 = vector.broadcast %cst_14 : f32 to vector<2x128xf32>
      %25 = arith.select %23, %17, %24 : vector<2x128xi1>, vector<2x128xf32>
      %cst_15 = arith.constant 0.000000e+00 : f32
      %26 = vector.broadcast %cst_15 : f32 to vector<2x128xf32>
      %27 = arith.select %23, %15, %26 : vector<2x128xi1>, vector<2x128xf32>
      %cst_16 = arith.constant 0.000000e+00 : f32
      %28 = vector.broadcast %cst_16 : f32 to vector<2x128xf32>
      %29 = arith.select %23, %16, %28 : vector<2x128xi1>, vector<2x128xf32>
      %30 = math.exp %25 : vector<2x128xf32>
      %31 = arith.mulf %30, %27 : vector<2x128xf32>
      %cst_17 = arith.constant 8.000000e-01 : f32
      %cst_18 = arith.constant 1.200000e+00 : f32
      %32 = vector.broadcast %cst_17 : f32 to vector<2x128xf32>
      %33 = arith.maximumf %32, %30 : vector<2x128xf32>
      %34 = vector.broadcast %cst_18 : f32 to vector<2x128xf32>
      %35 = arith.minimumf %34, %33 : vector<2x128xf32>
      %36 = arith.mulf %35, %27 : vector<2x128xf32>
      %37 = arith.minimumf %31, %36 : vector<2x128xf32>
      %cst_19 = arith.constant 0.000000e+00 : f32
      %38 = vector.broadcast %cst_19 : f32 to vector<2x128xf32>
      %39 = arith.subf %38, %37 : vector<2x128xf32>
      %40 = arith.mulf %39, %29 : vector<2x128xf32>
      %41 = arith.cmpf ogt, %31, %36 : vector<2x128xf32>
      %cst_20 = arith.constant 0.000000e+00 : f32
      %42 = vector.broadcast %cst_20 : f32 to vector<2x128xf32>
      %43 = arith.select %41, %29, %42 : vector<2x128xi1>, vector<2x128xf32>
      %44 = arith.addf %10, %40 : vector<2x128xf32>
      %45 = arith.addf %11, %43 : vector<2x128xf32>
      %46 = arith.addf %12, %29 : vector<2x128xf32>
      %c0_21 = arith.constant 0 : index
      %c0_22 = arith.constant 0 : index
      %47 = vector.load %arg6[%c0_21, %c0_22] : memref<2x128xf32, #tpu.memory_space<vmem>>, vector<2x128xf32>
      %48 = arith.addf %47, %44 : vector<2x128xf32>
      %c0_23 = arith.constant 0 : index
      %c0_24 = arith.constant 0 : index
      %49 = vector.load %arg6[%c0_23, %c0_24] : memref<2x128xf32, #tpu.memory_space<vmem>>, vector<2x128xf32>
      tpu.vector_store %arg6[%c0_23, %c0_24], %48 {strides = array<i32>} : memref<2x128xf32, #tpu.memory_space<vmem>>, vector<2x128xf32>,
      %c0_25 = arith.constant 0 : index
      %c0_26 = arith.constant 0 : index
      %50 = vector.load %arg8[%c0_25, %c0_26] : memref<2x128xf32, #tpu.memory_space<vmem>>, vector<2x128xf32>
      %51 = arith.addf %50, %45 : vector<2x128xf32>
      %c0_27 = arith.constant 0 : index
      %c0_28 = arith.constant 0 : index
      %52 = vector.load %arg8[%c0_27, %c0_28] : memref<2x128xf32, #tpu.memory_space<vmem>>, vector<2x128xf32>
      tpu.vector_store %arg8[%c0_27, %c0_28], %51 {strides = array<i32>} : memref<2x128xf32, #tpu.memory_space<vmem>>, vector<2x128xf32>,
      %c0_29 = arith.constant 0 : index
      %c0_30 = arith.constant 0 : index
      %53 = vector.load %arg7[%c0_29, %c0_30] : memref<2x128xf32, #tpu.memory_space<vmem>>, vector<2x128xf32>
      %54 = arith.addf %53, %46 : vector<2x128xf32>
      %c0_31 = arith.constant 0 : index
      %c0_32 = arith.constant 0 : index
      %55 = vector.load %arg7[%c0_31, %c0_32] : memref<2x128xf32, #tpu.memory_space<vmem>>, vector<2x128xf32>
      tpu.vector_store %arg7[%c0_31, %c0_32], %54 {strides = array<i32>} : memref<2x128xf32, #tpu.memory_space<vmem>>, vector<2x128xf32>,
    } else {
    }
    %true = arith.constant true
    %7 = arith.xori %4, %true : i1
    %8 = arith.extui %7 : i1 to i32
    %c0_i32_3 = arith.constant 0 : i32
    %9 = arith.cmpi ne, %8, %c0_i32_3 : i32
    scf.if %9 {
      %cst = arith.constant 0.000000e+00 : f32
      %10 = vector.broadcast %cst : f32 to vector<2x128xf32>
      %cst_4 = arith.constant 0.000000e+00 : f32
      %11 = vector.broadcast %cst_4 : f32 to vector<2x128xf32>
      %cst_5 = arith.constant 0.000000e+00 : f32
      %12 = vector.broadcast %cst_5 : f32 to vector<2x128xf32>
      %c0 = arith.constant 0 : index
      %c0_6 = arith.constant 0 : index
      %13 = vector.load %arg2[%c0, %c0_6] : memref<2x128xf32, #tpu.memory_space<vmem>>, vector<2x128xf32>
      %c0_7 = arith.constant 0 : index
      %c0_8 = arith.constant 0 : index
      %14 = vector.load %arg3[%c0_7, %c0_8] : memref<2x128xf32, #tpu.memory_space<vmem>>, vector<2x128xf32>
      %c0_9 = arith.constant 0 : index
      %c0_10 = arith.constant 0 : index
      %15 = vector.load %arg4[%c0_9, %c0_10] : memref<2x128xf32, #tpu.memory_space<vmem>>, vector<2x128xf32>
      %c0_11 = arith.constant 0 : index
      %c0_12 = arith.constant 0 : index
      %16 = vector.load %arg5[%c0_11, %c0_12] : memref<2x128xf32, #tpu.memory_space<vmem>>, vector<2x128xf32>
      %17 = arith.subf %13, %14 : vector<2x128xf32>
      %18 = math.exp %17 : vector<2x128xf32>
      %19 = arith.mulf %18, %15 : vector<2x128xf32>
      %cst_13 = arith.constant 8.000000e-01 : f32
      %cst_14 = arith.constant 1.200000e+00 : f32
      %20 = vector.broadcast %cst_13 : f32 to vector<2x128xf32>
      %21 = arith.maximumf %20, %18 : vector<2x128xf32>
      %22 = vector.broadcast %cst_14 : f32 to vector<2x128xf32>
      %23 = arith.minimumf %22, %21 : vector<2x128xf32>
      %24 = arith.mulf %23, %15 : vector<2x128xf32>
      %25 = arith.minimumf %19, %24 : vector<2x128xf32>
      %cst_15 = arith.constant 0.000000e+00 : f32
      %26 = vector.broadcast %cst_15 : f32 to vector<2x128xf32>
      %27 = arith.subf %26, %25 : vector<2x128xf32>
      %28 = arith.mulf %27, %16 : vector<2x128xf32>
      %29 = arith.cmpf ogt, %19, %24 : vector<2x128xf32>
      %cst_16 = arith.constant 0.000000e+00 : f32
      %30 = vector.broadcast %cst_16 : f32 to vector<2x128xf32>
      %31 = arith.select %29, %16, %30 : vector<2x128xi1>, vector<2x128xf32>
      %32 = arith.addf %10, %28 : vector<2x128xf32>
      %33 = arith.addf %11, %31 : vector<2x128xf32>
      %34 = arith.addf %12, %16 : vector<2x128xf32>
      %c0_17 = arith.constant 0 : index
      %c0_18 = arith.constant 0 : index
      %35 = vector.load %arg6[%c0_17, %c0_18] : memref<2x128xf32, #tpu.memory_space<vmem>>, vector<2x128xf32>
      %36 = arith.addf %35, %32 : vector<2x128xf32>
      %c0_19 = arith.constant 0 : index
      %c0_20 = arith.constant 0 : index
      %37 = vector.load %arg6[%c0_19, %c0_20] : memref<2x128xf32, #tpu.memory_space<vmem>>, vector<2x128xf32>
      tpu.vector_store %arg6[%c0_19, %c0_20], %36 {strides = array<i32>} : memref<2x128xf32, #tpu.memory_space<vmem>>, vector<2x128xf32>,
      %c0_21 = arith.constant 0 : index
      %c0_22 = arith.constant 0 : index
      %38 = vector.load %arg8[%c0_21, %c0_22] : memref<2x128xf32, #tpu.memory_space<vmem>>, vector<2x128xf32>
      %39 = arith.addf %38, %33 : vector<2x128xf32>
      %c0_23 = arith.constant 0 : index
      %c0_24 = arith.constant 0 : index
      %40 = vector.load %arg8[%c0_23, %c0_24] : memref<2x128xf32, #tpu.memory_space<vmem>>, vector<2x128xf32>
      tpu.vector_store %arg8[%c0_23, %c0_24], %39 {strides = array<i32>} : memref<2x128xf32, #tpu.memory_space<vmem>>, vector<2x128xf32>,
      %c0_25 = arith.constant 0 : index
      %c0_26 = arith.constant 0 : index
      %41 = vector.load %arg7[%c0_25, %c0_26] : memref<2x128xf32, #tpu.memory_space<vmem>>, vector<2x128xf32>
      %42 = arith.addf %41, %34 : vector<2x128xf32>
      %c0_27 = arith.constant 0 : index
      %c0_28 = arith.constant 0 : index
      %43 = vector.load %arg7[%c0_27, %c0_28] : memref<2x128xf32, #tpu.memory_space<vmem>>, vector<2x128xf32>
      tpu.vector_store %arg7[%c0_27, %c0_28], %42 {strides = array<i32>} : memref<2x128xf32, #tpu.memory_space<vmem>>, vector<2x128xf32>,
    } else {
    }
    return
  }
  func.func @transform_0(%arg0: i32, %arg1: i32) -> (i32, i32) {
    %c0_i32 = arith.constant 0 : i32
    return %arg0, %arg1 : i32, i32
  }
  func.func @transform_1(%arg0: i32, %arg1: i32) -> (i32, i32) {
    %c0_i32 = arith.constant 0 : i32
    return %arg0, %arg1 : i32, i32
  }
  func.func @transform_2(%arg0: i32, %arg1: i32) -> (i32, i32) {
    %c0_i32 = arith.constant 0 : i32
    return %arg0, %arg1 : i32, i32
  }
  func.func @transform_3(%arg0: i32, %arg1: i32) -> (i32, i32) {
    %c0_i32 = arith.constant 0 : i32
    return %arg0, %arg1 : i32, i32
  }
  func.func @transform_4(%arg0: i32, %arg1: i32) -> (i32, i32) {
    %c0_i32 = arith.constant 0 : i32
    %c0_i32_0 = arith.constant 0 : i32
    return %arg0, %c0_i32 : i32, i32
  }
  func.func @transform_5(%arg0: i32, %arg1: i32) -> (i32, i32) {
    %c0_i32 = arith.constant 0 : i32
    %c0_i32_0 = arith.constant 0 : i32
    return %arg0, %c0_i32 : i32, i32
  }
  func.func @transform_6(%arg0: i32, %arg1: i32) -> (i32, i32) {
    %c0_i32 = arith.constant 0 : i32
    %c0_i32_0 = arith.constant 0 : i32
    return %arg0, %c0_i32 : i32, i32
  }
}

</mosaic_0001>

<llo_original>
// kernel: tpu_custom_call.1
$region0: #{tpu_custom_call.1}
  #allocation0 [shape = 'u32[]', space=smem, size = 0x4, offset = 0x4, fixed_abs, tag = 'smem constant byte address 0x4 - core index']
  #allocation1 [shape = 'u32[144,128]{1,0:T(1,128)}', space=vmem, size = 0x12000, scoped, tag = 'internal scratch']
  %s0 = inlined_call_operand.hbm [shape: f32[2,8], index: 0, kind: input, shape index: {}]
  %s1 = inlined_call_operand.hbm [shape: f32[2,8], index: 1, kind: input, shape index: {}]
  %s2 = inlined_call_operand.hbm [shape: f32[2,8], index: 2, kind: input, shape index: {}]
  %s3 = inlined_call_operand.hbm [shape: f32[2,8], index: 3, kind: input, shape index: {}]
  %s4 = inlined_call_operand.hbm [shape: f32[2,128], index: 4, kind: output, shape index: {0}]
  %s5 = inlined_call_operand.hbm [shape: f32[2,128], index: 5, kind: output, shape index: {1}]
  %s6 = inlined_call_operand.hbm [shape: f32[2,128], index: 6, kind: output, shape index: {2}]
  %7 = xla_tuple %s4, %s5, %s6
  %s8 = sld [smem:[#allocation0]]
  $region70: #{tpu_custom_call.1} parent=0
    _
  %s10 = ssub.s32 1, %s8
  %s11 = scalar_select 0, %s10, %s8
  $region1: #{tpu_custom_call.1} parent=0
    #allocation2 [shape = 'u8[1024]{0}', space=vmem, size = 0x400, scoped, tag = 'input window, operand 0, single buffered']
    #allocation3 [shape = 's32[1]{0}', space=sflag, size = 0x4, scoped, tag = 'scoped memory for tpu_custom_call.1']
    #allocation4 [shape = 's32[1]{0}', space=sflag, size = 0x4, scoped, tag = 'scoped memory for tpu_custom_call.1']
    #allocation5 [shape = 'u8[1024]{0}', space=vmem, size = 0x400, scoped, tag = 'input window, operand 1, single buffered']
    #allocation6 [shape = 's32[1]{0}', space=sflag, size = 0x4, scoped, tag = 'scoped memory for tpu_custom_call.1']
    #allocation7 [shape = 'u8[1024]{0}', space=vmem, size = 0x400, scoped, tag = 'input window, operand 2, single buffered']
    #allocation8 [shape = 'u8[1024]{0}', space=vmem, size = 0x400, scoped, tag = 'input window, operand 3, single buffered']
    #allocation9 [shape = 's32[1]{0}', space=sflag, size = 0x4, scoped, tag = 'scoped memory for tpu_custom_call.1']
    #allocation10 [shape = 'u8[1024]{0}', space=vmem, size = 0x400, scoped, tag = 'output window, operand 0, single buffered']
    #allocation11 [shape = 'u8[1024]{0}', space=vmem, size = 0x400, scoped, tag = 'output window, operand 1, single buffered']
    #allocation12 [shape = 's32[1]{0}', space=sflag, size = 0x4, scoped, tag = 'scoped memory for tpu_custom_call.1']
    #allocation13 [shape = 'u8[1024]{0}', space=vmem, size = 0x400, scoped, tag = 'output window, operand 2, single buffered']
    %12 = vsyncpa [#allocation3], 0
    %13 = vsyncpa [#allocation6], 0
    %14 = vsyncpa [#allocation9], 0
    %15 = vsyncpa [#allocation4], 0
    %16 = vsyncpa [#allocation12], 0
    // Predicated region
    $region2: #{tpu_custom_call.1} parent=1 // pred_check
      _
    $region3: #{tpu_custom_call.1} parent=1 // pred_check_branch
      %18 = sbr.rel (0) target = $region5
    $region4: #{tpu_custom_call.1} parent=1 // pred_region
      %s20 = ssub.s32 32, 32
      %21 = vsyncadd [#allocation3], %s20
      %s23 = sshll.u32 [#allocation2], 4
      %s24 = int_to_ptr.vmem [resolvable:$true] %s23
      %26 = dma.hbm_to_vmem [thread:$0]  %s0, 32, %s24, [#allocation3]
    $region5: #{tpu_custom_call.1} parent=1 // pred_fallthru
      _
    // Predicated region
    $region6: #{tpu_custom_call.1} parent=1 // pred_check
      _
    $region7: #{tpu_custom_call.1} parent=1 // pred_check_branch
      %28 = sbr.rel (0) target = $region9
    $region8: #{tpu_custom_call.1} parent=1 // pred_region
      %s30 = ssub.s32 32, 32
      %31 = vsyncadd [#allocation6], %s30
      %s33 = sshll.u32 [#allocation5], 4
      %s34 = int_to_ptr.vmem [resolvable:$true] %s33
      %36 = dma.hbm_to_vmem [thread:$0]  %s1, 32, %s34, [#allocation6]
    $region9: #{tpu_custom_call.1} parent=1 // pred_fallthru
      _
    // Predicated region
    $region10: #{tpu_custom_call.1} parent=1 // pred_check
      _
    $region11: #{tpu_custom_call.1} parent=1 // pred_check_branch
      %38 = sbr.rel (0) target = $region13
    $region12: #{tpu_custom_call.1} parent=1 // pred_region
      %s40 = ssub.s32 32, 32
      %41 = vsyncadd [#allocation6], %s40
      %s43 = sshll.u32 [#allocation7], 4
      %s44 = int_to_ptr.vmem [resolvable:$true] %s43
      %46 = dma.hbm_to_vmem [thread:$0]  %s2, 32, %s44, [#allocation6]
    $region13: #{tpu_custom_call.1} parent=1 // pred_fallthru
      _
    // Predicated region
    $region14: #{tpu_custom_call.1} parent=1 // pred_check
      _
    $region15: #{tpu_custom_call.1} parent=1 // pred_check_branch
      %48 = sbr.rel (0) target = $region17
    $region16: #{tpu_custom_call.1} parent=1 // pred_region
      %s50 = ssub.s32 32, 32
      %51 = vsyncadd [#allocation9], %s50
      %s53 = sshll.u32 [#allocation8], 4
      %s54 = int_to_ptr.vmem [resolvable:$true] %s53
      %56 = dma.hbm_to_vmem [thread:$0]  %s3, 32, %s54, [#allocation9]
    $region17: #{tpu_custom_call.1} parent=1 // pred_fallthru
      _
    // Predicated region
    $region18: #{tpu_custom_call.1} parent=1 // pred_check
      _
    $region19: #{tpu_custom_call.1} parent=1 // pred_check_branch
      %58 = sbr.rel (0) target = $region21
    $region20: #{tpu_custom_call.1} parent=1 // pred_region
      %59 = dma.done [#allocation3], 32
    $region21: #{tpu_custom_call.1} parent=1 // pred_fallthru
      _
    // Predicated region
    $region22: #{tpu_custom_call.1} parent=1 // pred_check
      _
    $region23: #{tpu_custom_call.1} parent=1 // pred_check_branch
      %61 = sbr.rel (0) target = $region25
    $region24: #{tpu_custom_call.1} parent=1 // pred_region
      %62 = dma.done [#allocation6], 32
    $region25: #{tpu_custom_call.1} parent=1 // pred_fallthru
      _
    // Predicated region
    $region26: #{tpu_custom_call.1} parent=1 // pred_check
      _
    $region27: #{tpu_custom_call.1} parent=1 // pred_check_branch
      %64 = sbr.rel (0) target = $region29
    $region28: #{tpu_custom_call.1} parent=1 // pred_region
      %65 = dma.done [#allocation6], 32
    $region29: #{tpu_custom_call.1} parent=1 // pred_fallthru
      _
    // Predicated region
    $region30: #{tpu_custom_call.1} parent=1 // pred_check
      _
    $region31: #{tpu_custom_call.1} parent=1 // pred_check_branch
      %67 = sbr.rel (0) target = $region33
    $region32: #{tpu_custom_call.1} parent=1 // pred_region
      %68 = dma.done [#allocation9], 32
    $region33: #{tpu_custom_call.1} parent=1 // pred_fallthru
      _
    %p69 = scmp.eq.s32.totalorder 0, 0
    // Predicated region
    $region34: #{tpu_custom_call.1} parent=1 // pred_check
      %p70 = pneg %p69
    $region35: #{tpu_custom_call.1} parent=1 // pred_check_branch
      %72 = sbr.rel (%p70) target = $region37
    $region36: #{tpu_custom_call.1} parent=1 // pred_region
      %73 = vst [vmem:[#allocation10] sm:$0x3] 0.0
      %74 = vst [vmem:[#allocation13] sm:$0x3] 0.0
      %75 = vst [vmem:[#allocation11] sm:$0x3] 0.0
    $region37: #{tpu_custom_call.1} parent=1 // pred_fallthru
      _
    %s76 = smul.u32 0, 128
    %p77 = scmp.ge.s32.totalorder 0, 0
    // Predicated region
    $region38: #{tpu_custom_call.1} parent=1 // pred_check
      %p78 = pneg %p77
    $region39: #{tpu_custom_call.1} parent=1 // pred_check_branch
      %80 = sbr.rel (%p78) target = $region41
    $region40: #{tpu_custom_call.1} parent=1 // pred_region
      %v81 = vld [vmem:[#allocation2] sm:$0x3]
      %v82 = vld [vmem:[#allocation5] sm:$0x3]
      %v83 = vld [vmem:[#allocation7] sm:$0x3]
      %v84 = vld [vmem:[#allocation8] sm:$0x3]
      %v85 = vsub.f32 %v81, %v82
      %v86 = vlaneseq
      %v87 = vand.u32 %v86, 127
      %v88 = vstv %s76
      %v89 = vadd.s32 %v88, %v87
      %vm90 = vcmp.lt.s32.totalorder %v89, 8
      %v91 = vsel %vm90, %v85, 0.0
      %v92 = vsel %vm90, %v83, 0.0
      %v93 = vsel %vm90, %v84, 0.0
      %v94 = vmul.f32 %v91, 1.442695
      %v95 = vpow.pop %v94
      %v96 = vmul.f32 %v95, %v92
      %v97 = vmax.f32 %v95, 0.8
      %v98 = vmin.f32 %v97, 1.2
      %v99 = vmul.f32 %v98, %v92
      %v100 = vmin.f32 %v96, %v99
      %v101 = vsub.f32 0.0, %v100
      %v102 = vmul.f32 %v101, %v93
      %vm103 = vcmp.gt.f32.partialorder %v96, %v99
      %v104 = vsel %vm103, %v93, 0.0
      %v105 = vadd.f32 %v102, 0.0
      %v106 = vadd.f32 %v104, 0.0
      %v107 = vadd.f32 %v93, 0.0
      %v108 = vld [vmem:[#allocation10] sm:$0x3]
      %v109 = vadd.f32 %v108, %v105
      %110 = vst [vmem:[#allocation10] sm:$0x3] %v109
      %v111 = vld [vmem:[#allocation13] sm:$0x3]
      %v112 = vadd.f32 %v111, %v106
      %113 = vst [vmem:[#allocation13] sm:$0x3] %v112
      %v114 = vld [vmem:[#allocation11] sm:$0x3]
      %v115 = vadd.f32 %v114, %v107
      %116 = vst [vmem:[#allocation11] sm:$0x3] %v115
    $region41: #{tpu_custom_call.1} parent=1 // pred_fallthru
      _
    %p117 = scmp.lt.s32.totalorder 0, 0
    // Predicated region
    $region42: #{tpu_custom_call.1} parent=1 // pred_check
      %p118 = pneg %p117
    $region43: #{tpu_custom_call.1} parent=1 // pred_check_branch
      %120 = sbr.rel (%p118) target = $region45
    $region44: #{tpu_custom_call.1} parent=1 // pred_region
      %v121 = vld [vmem:[#allocation2] sm:$0x3]
      %v122 = vld [vmem:[#allocation5] sm:$0x3]
      %v123 = vld [vmem:[#allocation7] sm:$0x3]
      %v124 = vld [vmem:[#allocation8] sm:$0x3]
      %v125 = vsub.f32 %v121, %v122
      %v126 = vmul.f32 %v125, 1.442695
      %v127 = vpow.pop %v126
      %v128 = vmul.f32 %v127, %v123
      %v129 = vmax.f32 %v127, 0.8
      %v130 = vmin.f32 %v129, 1.2
      %v131 = vmul.f32 %v130, %v123
      %v132 = vmin.f32 %v128, %v131
      %v133 = vsub.f32 0.0, %v132
      %v134 = vmul.f32 %v133, %v124
      %vm135 = vcmp.gt.f32.partialorder %v128, %v131
      %v136 = vsel %vm135, %v124, 0.0
      %v137 = vadd.f32 %v134, 0.0
      %v138 = vadd.f32 %v136, 0.0
      %v139 = vadd.f32 %v124, 0.0
      %v140 = vld [vmem:[#allocation10] sm:$0x3]
      %v141 = vadd.f32 %v140, %v137
      %142 = vst [vmem:[#allocation10] sm:$0x3] %v141
      %v143 = vld [vmem:[#allocation13] sm:$0x3]
      %v144 = vadd.f32 %v143, %v138
      %145 = vst [vmem:[#allocation13] sm:$0x3] %v144
      %v146 = vld [vmem:[#allocation11] sm:$0x3]
      %v147 = vadd.f32 %v146, %v139
      %148 = vst [vmem:[#allocation11] sm:$0x3] %v147
    $region45: #{tpu_custom_call.1} parent=1 // pred_fallthru
      _
    // Predicated region
    $region46: #{tpu_custom_call.1} parent=1 // pred_check
      _
    $region47: #{tpu_custom_call.1} parent=1 // pred_check_branch
      %150 = sbr.rel (0) target = $region49
    $region48: #{tpu_custom_call.1} parent=1 // pred_region
      %s152 = ssub.s32 32, 32
      %153 = vsyncadd [#allocation4], %s152
      %s155 = sshll.u32 [#allocation10], 4
      %s156 = int_to_ptr.vmem [resolvable:$true] %s155
      %158 = dma.vmem_to_hbm [thread:$0]  %s156, 32, %s4, [#allocation4]
    $region49: #{tpu_custom_call.1} parent=1 // pred_fallthru
      _
    // Predicated region
    $region50: #{tpu_custom_call.1} parent=1 // pred_check
      _
    $region51: #{tpu_custom_call.1} parent=1 // pred_check_branch
      %160 = sbr.rel (0) target = $region53
    $region52: #{tpu_custom_call.1} parent=1 // pred_region
      %s162 = ssub.s32 32, 32
      %163 = vsyncadd [#allocation12], %s162
      %s165 = sshll.u32 [#allocation11], 4
      %s166 = int_to_ptr.vmem [resolvable:$true] %s165
      %168 = dma.vmem_to_hbm [thread:$0]  %s166, 32, %s5, [#allocation12]
    $region53: #{tpu_custom_call.1} parent=1 // pred_fallthru
      _
    // Predicated region
    $region54: #{tpu_custom_call.1} parent=1 // pred_check
      _
    $region55: #{tpu_custom_call.1} parent=1 // pred_check_branch
      %170 = sbr.rel (0) target = $region57
    $region56: #{tpu_custom_call.1} parent=1 // pred_region
      %s172 = ssub.s32 32, 32
      %173 = vsyncadd [#allocation12], %s172
      %s175 = sshll.u32 [#allocation13], 4
      %s176 = int_to_ptr.vmem [resolvable:$true] %s175
      %178 = dma.vmem_to_hbm [thread:$0]  %s176, 32, %s6, [#allocation12]
    $region57: #{tpu_custom_call.1} parent=1 // pred_fallthru
      _
    // Predicated region
    $region58: #{tpu_custom_call.1} parent=1 // pred_check
      _
    $region59: #{tpu_custom_call.1} parent=1 // pred_check_branch
      %180 = sbr.rel (0) target = $region61
    $region60: #{tpu_custom_call.1} parent=1 // pred_region
      %181 = dma.done [#allocation4], 32
    $region61: #{tpu_custom_call.1} parent=1 // pred_fallthru
      _
    // Predicated region
    $region62: #{tpu_custom_call.1} parent=1 // pred_check
      _
    $region63: #{tpu_custom_call.1} parent=1 // pred_check_branch
      %183 = sbr.rel (0) target = $region65
    $region64: #{tpu_custom_call.1} parent=1 // pred_region
      %184 = dma.done [#allocation12], 32
    $region65: #{tpu_custom_call.1} parent=1 // pred_fallthru
      _
    // Predicated region
    $region66: #{tpu_custom_call.1} parent=1 // pred_check
      _
    $region67: #{tpu_custom_call.1} parent=1 // pred_check_branch
      %186 = sbr.rel (0) target = $region69
    $region68: #{tpu_custom_call.1} parent=1 // pred_region
      %187 = dma.done [#allocation12], 32
    $region69: #{tpu_custom_call.1} parent=1 // pred_fallthru
      _
    %188 = vsyncpa [#allocation3], 1
    %189 = vsyncpa [#allocation6], 1
    %190 = vsyncpa [#allocation9], 1
    %191 = vsyncpa [#allocation4], 1
    %192 = vsyncpa [#allocation12], 1

</llo_original>
